<compile_context>
chip_gen: v7x
topology: tpu7x:2x2x1
jax: 0.10.0
libtpu: 0.0.40
codegen_flags: <defaults>
</compile_context>

<pallas_src>
import functools
import math

import numpy as np
import jax
import jax.numpy as jnp
from jax import lax
from jax.experimental import pallas as pl
from jax.experimental.pallas import tpu as pltpu


# ------------------------- fused Pallas kernel -------------------------

def _mha_kernel(x_ref, w_ref, o_ref, qkv_ref, g_ref, oh_ref, *, num_heads, kv_block):
    """One (batch, head) grid step: project R rows, run softmax(dim=0) attention."""
    R, E3 = qkv_ref.shape          # (R, 3E) -- rows h*R:(h+1)*R of the fused QKV
    E = E3 // 3
    H = num_heads
    Dh = E // H
    S = H * R                      # full sequence length

    # --- fused QKV projection for this head's R rows (bf16 MXU, f32 acc) -----
    qkv_ref[...] = jnp.dot(x_ref[...], w_ref[...],
                           preferred_element_type=jnp.float32)

    # --- gather the (row-permuted) head view ----------------------------------
    # Fused-weight column group p holds [q_p | k_p | v_p], so the gather is one
    # (R, 3*Dh)-wide VMEM copy per block p (lane-dense for Dh >= 43).
    for p in range(H):
        g_ref[p * R:(p + 1) * R, :] = qkv_ref[:, 3 * p * Dh:3 * (p + 1) * Dh]

    q = g_ref[:, 0:Dh].astype(jnp.bfloat16)         # 1/sqrt(Dh) already folded into Wq
    k = g_ref[:, Dh:2 * Dh].astype(jnp.bfloat16)
    v = g_ref[:, 2 * Dh:3 * Dh].astype(jnp.bfloat16)

    # --- attention, tiled along the key axis -----------------------------------
    # Softmax is over dim 0 (the query axis): each key column is normalised
    # independently, so each key block is fully self-contained; accumulate p@v.
    oh_ref[...] = jnp.zeros_like(oh_ref)
    for k0 in range(0, S, kv_block):
        k1 = min(k0 + kv_block, S)
        k_blk = k[k0:k1, :]
        v_blk = v[k0:k1, :]
        # scores = q @ k_blk.T via NT dot_general (no transpose materialised)
        s = lax.dot_general(q, k_blk, (((1,), (1,)), ((), ())),
                            preferred_element_type=jnp.float32)     # (S, k1-k0)
        m = jnp.max(s, axis=0, keepdims=True)
        e = jnp.exp(s - m)
        p_mat = e * pl.reciprocal(jnp.sum(e, axis=0, keepdims=True), approx=True)
        oh_ref[...] += jnp.dot(p_mat.astype(jnp.bfloat16), v_blk,
                               preferred_element_type=jnp.float32)

    # --- scatter back to the lane-dense (R, E) output slab ---------------------
    # Output column block u of this head's rows == permuted head-output rows
    # u*R:(u+1)*R (inverse of the gather permutation).
    for u in range(H):
        o_ref[:, u * Dh:(u + 1) * Dh] = oh_ref[u * R:(u + 1) * R, :]


# ------------------------- host-side weight fusion (one-time, at init) -------------------------

def fuse_mha_weights(wq, wk, wv, num_heads):
    """Build the fused (E, 3E) bf16 projection matrix.

    Columns are grouped per sub-head block p as [ Wq_p/sqrt(Dh) | Wk_p | Wv_p ].
    This is a one-time weight transform (module init), not a per-call op.
    """
    E = wq.shape[1]
    H = num_heads
    assert E % H == 0, "embed_dim must be divisible by num_heads"
    Dh = E // H
    wq_scaled = wq * (1.0 / math.sqrt(Dh))
    groups = []
    for p in range(H):
        sl = slice(p * Dh, (p + 1) * Dh)
        groups += [wq_scaled[:, sl], wk[:, sl], wv[:, sl]]
    return jnp.concatenate(groups, axis=1).astype(jnp.bfloat16)      # (E, 3E)


# ------------------------- wrapper -------------------------

def mha_forward(x, w_fused, num_heads):
    """Pallas forward pass matching MultiHeadAttention.forward (batch=True)."""
    B, S, E = x.shape
    H = num_heads
    assert E % H == 0, "embed_dim must be divisible by num_heads"
    assert S % H == 0, "kernel assumes seq_len % num_heads == 0"
    assert w_fused.shape == (E, 3 * E)
    Dh = E // H
    R = S // H                                  # rows of the (S,E) slab owned by each head

    kv_block = S if S <= 512 else 512           # key-axis score tile
    kernel = functools.partial(_mha_kernel, num_heads=H, kv_block=kv_block)

    # --- explicit VMEM budget (v7x only has 64 MiB physical VMEM) ------------
    def tile_bytes(rows, cols, itemsize, sublane=8):
        r = -(-rows // sublane) * sublane
        c = -(-cols // 128) * 128
        return r * c * itemsize

    vmem_est = (
        2 * tile_bytes(R, E, 2, 16)             # x block (bf16, double-buffered)
        + 2 * tile_bytes(E, 3 * E, 2, 16)       # fused weights (bf16, 2 bufs)
        + 2 * tile_bytes(R, E, 4)               # output block (f32, 2 bufs)
        + tile_bytes(R, 3 * E, 4)               # per-head fused QKV scratch
        + tile_bytes(S, 3 * Dh, 4)              # gathered [q|k|v] head view
        + tile_bytes(S, Dh, 4)                  # per-head output accumulator
        + 2 * tile_bytes(S, kv_block, 4)        # live score / prob tiles
    )
    vmem_limit = int(min(max(2 * vmem_est, 8 * 1024 * 1024), 64 * 1024 * 1024))

    # TODO(synk): the constant-index weight block is still double-buffered by the
    # default pipeline; pipeline_mode=pl.Buffered(1) on that BlockSpec would
    # reclaim one (E,3E) buffer on v7x at large E.
    return pl.pallas_call(
        kernel,
        grid=(B, H),                                              # B*H independent steps
        in_specs=[
            pl.BlockSpec((None, R, E), lambda b, h: (b, h, 0)),   # x rows of head h, batch b
            pl.BlockSpec((E, 3 * E), lambda b, h: (0, 0)),        # resident fused weights
        ],
        out_specs=pl.BlockSpec((None, R, E), lambda b, h: (b, h, 0)),
        out_shape=jax.ShapeDtypeStruct((B, S, E), jnp.float32),
        scratch_shapes=[
            pltpu.VMEM((R, 3 * E), jnp.float32),    # fused QKV rows for this head
            pltpu.VMEM((S, 3 * Dh), jnp.float32),   # gathered [q|k|v] head view
            pltpu.VMEM((S, Dh), jnp.float32),       # per-head output accumulator
        ],
        compiler_params=pltpu.CompilerParams(
            dimension_semantics=("parallel", "parallel"),
            vmem_limit_bytes=vmem_limit),
    )(x.astype(jnp.bfloat16), w_fused)


def multi_head_attention(x, wq, wk, wv, num_heads):
    """Convenience wrapper matching the module's parameter layout."""
    return mha_forward(x, fuse_mha_weights(wq, wk, wv, num_heads), num_heads)


# ------------------------- pure reference (for checking) -------------------------

def _reference(x, wq, wk, wv, num_heads):
    B, S, E = x.shape
    Dh = E // num_heads
    q = (x @ wq).reshape(B, num_heads, S, Dh)
    k = (x @ wk).reshape(B, num_heads, S, Dh)
    v = (x @ wv).reshape(B, num_heads, S, Dh)
    out = np.zeros((B, num_heads, S, Dh), np.float32)
    for i in range(B):
        for j in range(num_heads):
            s = q[i, j] @ k[i, j].T / np.sqrt(Dh)
            s = s - s.max(axis=0, keepdims=True)
            e = np.exp(s)
            p = e / e.sum(axis=0, keepdims=True)
            out[i, j] = p @ v[i, j]
    return out.reshape(B, S, E)


# ------------------------- main -------------------------

if __name__ == "__main__":
    B, S, E, H = 2, 64, 32, 4          # batch, seq, embed_dim, num_heads

    key = jax.random.PRNGKey(0)
    kx, kq, kk, kv_ = jax.random.split(key, 4)
    x = jax.random.normal(kx, (B, S, E), dtype=jnp.float32)
    # deterministic synthetic weights (scaled randn, shapes per module __init__)
    wq = 0.05 * jax.random.normal(kq, (E, E), dtype=jnp.float32)
    wk = 0.05 * jax.random.normal(kk, (E, E), dtype=jnp.float32)   # k_dim == embed_dim
    wv = 0.05 * jax.random.normal(kv_, (E, E), dtype=jnp.float32)  # v_dim == embed_dim

    w_fused = fuse_mha_weights(wq, wk, wv, H)     # one-time init-style transform
    out = mha_forward(x, w_fused, H)
    out = jax.block_until_ready(out)

    ref = _reference(np.asarray(x), np.asarray(wq), np.asarray(wk), np.asarray(wv), H)
    np.testing.assert_allclose(np.asarray(out), ref, rtol=5e-2, atol=5e-2)

    assert out.shape == (B, S, E)
    print("KERNEL_OK")
</pallas_src>

<mosaic_0001>
module attributes {stable_mosaic.version = 11 : i64} {
  func.func @_mha_kernel(%arg0: i32, %arg1: i32, %arg2: memref<1x16x32xbf16, #tpu.memory_space<vmem>>, %arg3: memref<32x96xbf16, #tpu.memory_space<vmem>>, %arg4: memref<1x16x32xf32, #tpu.memory_space<vmem>>, %arg5: memref<16x96xf32, #tpu.memory_space<vmem>>, %arg6: memref<64x24xf32, #tpu.memory_space<vmem>>, %arg7: memref<64x8xf32, #tpu.memory_space<vmem>>) attributes {dimension_semantics = [#tpu.dimension_semantics<parallel>, #tpu.dimension_semantics<parallel>], iteration_bounds = array<i64: 2, 4>, scalar_prefetch = 0 : i64, scratch_operands = 3 : i64, tpu.core_type = #tpu.core_type<tc>, window_params = [{transform_indices = @transform_0, window_bounds = array<i64: 1, 16, 32>}, {pipeline_mode = #tpu.pipeline_mode<synchronous>, transform_indices = @transform_1, window_bounds = array<i64: 32, 96>}, {transform_indices = @transform_2, window_bounds = array<i64: 1, 16, 32>}]} {
    %c0 = arith.constant 0 : index
    %c0_0 = arith.constant 0 : index
    %c0_1 = arith.constant 0 : index
    %0 = vector.load %arg2[%c0, %c0_0, %c0_1] : memref<1x16x32xbf16, #tpu.memory_space<vmem>>, vector<1x16x32xbf16>
    %1 = vector.shape_cast %0 : vector<1x16x32xbf16> to vector<16x32xbf16>
    %c0_2 = arith.constant 0 : index
    %c0_3 = arith.constant 0 : index
    %2 = vector.load %arg3[%c0_2, %c0_3] : memref<32x96xbf16, #tpu.memory_space<vmem>>, vector<32x96xbf16>
    %cst = arith.constant dense<0.000000e+00> : vector<16x96xf32>
    %3 = tpu.matmul %1, %2, %cst {dimension_numbers = #tpu.dot_dimension_numbers<[1], [0], [0], [1], [0, 0, 1, 1], [], []>} : vector<16x32xbf16>, vector<32x96xbf16>, vector<16x96xf32> -> vector<16x96xf32>
    %c0_4 = arith.constant 0 : index
    %c0_5 = arith.constant 0 : index
    %4 = vector.load %arg5[%c0_4, %c0_5] : memref<16x96xf32, #tpu.memory_space<vmem>>, vector<16x96xf32>
    tpu.vector_store %arg5[%c0_4, %c0_5], %3 {strides = array<i32>} : memref<16x96xf32, #tpu.memory_space<vmem>>, vector<16x96xf32>,
    %c0_6 = arith.constant 0 : index
    %c0_7 = arith.constant 0 : index
    %5 = vector.load %arg5[%c0_6, %c0_7] : memref<16x96xf32, #tpu.memory_space<vmem>>, vector<16x24xf32>
    %c0_8 = arith.constant 0 : index
    %c0_9 = arith.constant 0 : index
    %6 = vector.load %arg6[%c0_8, %c0_9] : memref<64x24xf32, #tpu.memory_space<vmem>>, vector<16x24xf32>
    tpu.vector_store %arg6[%c0_8, %c0_9], %5 {strides = array<i32>} : memref<64x24xf32, #tpu.memory_space<vmem>>, vector<16x24xf32>,
    %c0_10 = arith.constant 0 : index
    %c24 = arith.constant 24 : index
    %7 = vector.load %arg5[%c0_10, %c24] : memref<16x96xf32, #tpu.memory_space<vmem>>, vector<16x24xf32>
    %c16 = arith.constant 16 : index
    %c0_11 = arith.constant 0 : index
    %8 = vector.load %arg6[%c16, %c0_11] : memref<64x24xf32, #tpu.memory_space<vmem>>, vector<16x24xf32>
    tpu.vector_store %arg6[%c16, %c0_11], %7 {strides = array<i32>} : memref<64x24xf32, #tpu.memory_space<vmem>>, vector<16x24xf32>,
    %c0_12 = arith.constant 0 : index
    %c48 = arith.constant 48 : index
    %9 = vector.load %arg5[%c0_12, %c48] : memref<16x96xf32, #tpu.memory_space<vmem>>, vector<16x24xf32>
    %c32 = arith.constant 32 : index
    %c0_13 = arith.constant 0 : index
    %10 = vector.load %arg6[%c32, %c0_13] : memref<64x24xf32, #tpu.memory_space<vmem>>, vector<16x24xf32>
    tpu.vector_store %arg6[%c32, %c0_13], %9 {strides = array<i32>} : memref<64x24xf32, #tpu.memory_space<vmem>>, vector<16x24xf32>,
    %c0_14 = arith.constant 0 : index
    %c72 = arith.constant 72 : index
    %11 = vector.load %arg5[%c0_14, %c72] : memref<16x96xf32, #tpu.memory_space<vmem>>, vector<16x24xf32>
    %c48_15 = arith.constant 48 : index
    %c0_16 = arith.constant 0 : index
    %12 = vector.load %arg6[%c48_15, %c0_16] : memref<64x24xf32, #tpu.memory_space<vmem>>, vector<16x24xf32>
    tpu.vector_store %arg6[%c48_15, %c0_16], %11 {strides = array<i32>} : memref<64x24xf32, #tpu.memory_space<vmem>>, vector<16x24xf32>,
    %c0_17 = arith.constant 0 : index
    %c0_18 = arith.constant 0 : index
    %13 = vector.load %arg6[%c0_17, %c0_18] : memref<64x24xf32, #tpu.memory_space<vmem>>, vector<64x8xf32>
    %14 = arith.truncf %13 : vector<64x8xf32> to vector<64x8xbf16>
    %c0_19 = arith.constant 0 : index
    %c8 = arith.constant 8 : index
    %15 = vector.load %arg6[%c0_19, %c8] : memref<64x24xf32, #tpu.memory_space<vmem>>, vector<64x8xf32>
    %16 = arith.truncf %15 : vector<64x8xf32> to vector<64x8xbf16>
    %c0_20 = arith.constant 0 : index
    %c16_21 = arith.constant 16 : index
    %17 = vector.load %arg6[%c0_20, %c16_21] : memref<64x24xf32, #tpu.memory_space<vmem>>, vector<64x8xf32>
    %18 = arith.truncf %17 : vector<64x8xf32> to vector<64x8xbf16>
    %cst_22 = arith.constant 0.000000e+00 : f32
    %19 = vector.broadcast %cst_22 : f32 to vector<64x8xf32>
    %c0_23 = arith.constant 0 : index
    %c0_24 = arith.constant 0 : index
    %20 = vector.load %arg7[%c0_23, %c0_24] : memref<64x8xf32, #tpu.memory_space<vmem>>, vector<64x8xf32>
    tpu.vector_store %arg7[%c0_23, %c0_24], %19 {strides = array<i32>} : memref<64x8xf32, #tpu.memory_space<vmem>>, vector<64x8xf32>,
    %cst_25 = arith.constant dense<0.000000e+00> : vector<64x64xf32>
    %21 = tpu.matmul %14, %16, %cst_25 {dimension_numbers = #tpu.dot_dimension_numbers<[1], [1], [0], [0], [0, 0, 1, 0], [], []>} : vector<64x8xbf16>, vector<64x8xbf16>, vector<64x64xf32> -> vector<64x64xf32>
    %cst_26 = arith.constant dense<0xFF800000> : vector<64xf32>
    %22 = vector.multi_reduction <maximumf>, %21, %cst_26 [0] : vector<64x64xf32> to vector<64xf32>
    %23 = vector.shape_cast %22 : vector<64xf32> to vector<1x64xf32>
    %24 = vector.broadcast %23 : vector<1x64xf32> to vector<64x64xf32>
    %25 = arith.subf %21, %24 : vector<64x64xf32>
    %26 = math.exp %25 : vector<64x64xf32>
    %cst_27 = arith.constant dense<0.000000e+00> : vector<64xf32>
    %27 = vector.multi_reduction <add>, %26, %cst_27 [0] : vector<64x64xf32> to vector<64xf32>
    %28 = vector.shape_cast %27 : vector<64xf32> to vector<1x64xf32>
    %29 = tpu.reciprocal %28 {approx = true} : vector<1x64xf32> -> vector<1x64xf32>
    %30 = vector.broadcast %29 : vector<1x64xf32> to vector<64x64xf32>
    %31 = arith.mulf %26, %30 : vector<64x64xf32>
    %c0_28 = arith.constant 0 : index
    %c0_29 = arith.constant 0 : index
    %32 = vector.load %arg7[%c0_28, %c0_29] : memref<64x8xf32, #tpu.memory_space<vmem>>, vector<64x8xf32>
    %33 = arith.truncf %31 : vector<64x64xf32> to vector<64x64xbf16>
    %cst_30 = arith.constant dense<0.000000e+00> : vector<64x8xf32>
    %34 = tpu.matmul %33, %18, %cst_30 {dimension_numbers = #tpu.dot_dimension_numbers<[1], [0], [0], [1], [0, 0, 1, 1], [], []>} : vector<64x64xbf16>, vector<64x8xbf16>, vector<64x8xf32> -> vector<64x8xf32>
    %35 = arith.addf %32, %34 : vector<64x8xf32>
    %c0_31 = arith.constant 0 : index
    %c0_32 = arith.constant 0 : index
    %36 = vector.load %arg7[%c0_31, %c0_32] : memref<64x8xf32, #tpu.memory_space<vmem>>, vector<64x8xf32>
    tpu.vector_store %arg7[%c0_31, %c0_32], %35 {strides = array<i32>} : memref<64x8xf32, #tpu.memory_space<vmem>>, vector<64x8xf32>,
    %c0_33 = arith.constant 0 : index
    %c0_34 = arith.constant 0 : index
    %37 = vector.load %arg7[%c0_33, %c0_34] : memref<64x8xf32, #tpu.memory_space<vmem>>, vector<16x8xf32>
    %c0_35 = arith.constant 0 : index
    %c0_36 = arith.constant 0 : index
    %c0_37 = arith.constant 0 : index
    %38 = vector.load %arg4[%c0_35, %c0_36, %c0_37] : memref<1x16x32xf32, #tpu.memory_space<vmem>>, vector<1x16x8xf32>
    %39 = vector.shape_cast %38 : vector<1x16x8xf32> to vector<16x8xf32>
    %40 = vector.shape_cast %37 : vector<16x8xf32> to vector<1x16x8xf32>
    tpu.vector_store %arg4[%c0_35, %c0_36, %c0_37], %40 {strides = array<i32>} : memref<1x16x32xf32, #tpu.memory_space<vmem>>, vector<1x16x8xf32>,
    %c16_38 = arith.constant 16 : index
    %c0_39 = arith.constant 0 : index
    %41 = vector.load %arg7[%c16_38, %c0_39] : memref<64x8xf32, #tpu.memory_space<vmem>>, vector<16x8xf32>
    %c0_40 = arith.constant 0 : index
    %c0_41 = arith.constant 0 : index
    %c8_42 = arith.constant 8 : index
    %42 = vector.load %arg4[%c0_40, %c0_41, %c8_42] : memref<1x16x32xf32, #tpu.memory_space<vmem>>, vector<1x16x8xf32>
    %43 = vector.shape_cast %42 : vector<1x16x8xf32> to vector<16x8xf32>
    %44 = vector.shape_cast %41 : vector<16x8xf32> to vector<1x16x8xf32>
    tpu.vector_store %arg4[%c0_40, %c0_41, %c8_42], %44 {strides = array<i32>} : memref<1x16x32xf32, #tpu.memory_space<vmem>>, vector<1x16x8xf32>,
    %c32_43 = arith.constant 32 : index
    %c0_44 = arith.constant 0 : index
    %45 = vector.load %arg7[%c32_43, %c0_44] : memref<64x8xf32, #tpu.memory_space<vmem>>, vector<16x8xf32>
    %c0_45 = arith.constant 0 : index
    %c0_46 = arith.constant 0 : index
    %c16_47 = arith.constant 16 : index
    %46 = vector.load %arg4[%c0_45, %c0_46, %c16_47] : memref<1x16x32xf32, #tpu.memory_space<vmem>>, vector<1x16x8xf32>
    %47 = vector.shape_cast %46 : vector<1x16x8xf32> to vector<16x8xf32>
    %48 = vector.shape_cast %45 : vector<16x8xf32> to vector<1x16x8xf32>
    tpu.vector_store %arg4[%c0_45, %c0_46, %c16_47], %48 {strides = array<i32>} : memref<1x16x32xf32, #tpu.memory_space<vmem>>, vector<1x16x8xf32>,
    %c48_48 = arith.constant 48 : index
    %c0_49 = arith.constant 0 : index
    %49 = vector.load %arg7[%c48_48, %c0_49] : memref<64x8xf32, #tpu.memory_space<vmem>>, vector<16x8xf32>
    %c0_50 = arith.constant 0 : index
    %c0_51 = arith.constant 0 : index
    %c24_52 = arith.constant 24 : index
    %50 = vector.load %arg4[%c0_50, %c0_51, %c24_52] : memref<1x16x32xf32, #tpu.memory_space<vmem>>, vector<1x16x8xf32>
    %51 = vector.shape_cast %50 : vector<1x16x8xf32> to vector<16x8xf32>
    %52 = vector.shape_cast %49 : vector<16x8xf32> to vector<1x16x8xf32>
    tpu.vector_store %arg4[%c0_50, %c0_51, %c24_52], %52 {strides = array<i32>} : memref<1x16x32xf32, #tpu.memory_space<vmem>>, vector<1x16x8xf32>,
    return
  }
  func.func @transform_0(%arg0: i32, %arg1: i32) -> (i32, i32, i32) {
    %c0_i32 = arith.constant 0 : i32
    %c0_i32_0 = arith.constant 0 : i32
    return %arg0, %arg1, %c0_i32 : i32, i32, i32
  }
  func.func @transform_1(%arg0: i32, %arg1: i32) -> (i32, i32) {
    %c0_i32 = arith.constant 0 : i32
    %c0_i32_0 = arith.constant 0 : i32
    %c0_i32_1 = arith.constant 0 : i32
    return %c0_i32, %c0_i32_0 : i32, i32
  }
  func.func @transform_2(%arg0: i32, %arg1: i32) -> (i32, i32, i32) {
    %c0_i32 = arith.constant 0 : i32
    %c0_i32_0 = arith.constant 0 : i32
    return %arg0, %arg1, %c0_i32 : i32, i32, i32
  }
}

</mosaic_0001>

<llo_original>
// kernel: tpu_custom_call.1
$region0: #{tpu_custom_call.1}
  #allocation0 [shape = 'u32[]', space=smem, size = 0x4, offset = 0x4, fixed_abs, tag = 'smem constant byte address 0x4 - core index']
  #allocation1 [shape = 'u32[144,128]{1,0:T(1,128)}', space=vmem, size = 0x12000, scoped, tag = 'internal scratch']
  #allocation2 [shape = 'f32[16,96]{1,0:T(8,128)}', space=vmem, size = 0x2000, scoped, tag = 'scratch operand']
  #allocation3 [shape = 'f32[64,24]{1,0:T(8,128)}', space=vmem, size = 0x8000, scoped, tag = 'scratch operand']
  #allocation4 [shape = 'f32[64,8]{1,0:T(8,128)}', space=vmem, size = 0x8000, scoped, tag = 'scratch operand']
  %s0 = inlined_call_operand.vmem [shape: bf16[2,64,32], index: 0, kind: input, shape index: {}]
  %s1 = inlined_call_operand.vmem [shape: bf16[32,96], index: 1, kind: input, shape index: {}]
  %s2 = inlined_call_operand.vmem [shape: f32[2,64,32], index: 2, kind: output, shape index: {}]
  %s3 = sld [smem:[#allocation0]]
  $region41: #{tpu_custom_call.1} parent=0
    _
  %s5 = ssub.s32 1, %s3
  %s6 = scalar_select 0, %s5, %s3
  loop: start=0, step=1, limit=10
  $region2: #{tpu_custom_call.1} parent=0 // loop_pre_header
    _
  $region3: #{tpu_custom_call.1} parent=0 // loop_header
    %s8 = sphi 0, %s12
    %p9 = scmp.ge.s32.totalorder %s8, 10
    %s15 = sphi 0, %s27
    %s16 = sphi 0, %s23
    %s17 = sphi 0, %s15
    %s18 = sphi 0, %s16
    %s19 = sphi 0, %s17
    %s20 = sphi 0, %s18
    %s32 = sphi 0, %s34
    %s35 = sphi 0, %s32
    %s36 = sphi 0, %s35
    %s52 = sphi 0, %s36
    %s56 = sphi 0, %s56
    %s58 = sphi 0, %s56
    %s59 = sphi 0, %s58
    %s73 = sphi 0, %s59
    %s81 = sphi 0, %s83
    %s84 = sphi 0, %s81
    %s85 = sphi 0, %s84
    %s101 = sphi 0, %s85
  $region4: #{tpu_custom_call.1} parent=0 // loop_header_branch
    %11 = sbr.rel (%p9) target = $region8
  $region5: #{tpu_custom_call.1} parent=0 // loop_body
    %s13 = ssub.s32 %s8, 1
    %s14 = ssub.s32 %s8, 2
    %s21 = sadd.s32 1, %s16
    %p22 = scmp.ge.s32.totalorder %s21, 4
    %s23 = scalar_select %p22, 0, %s21
    %s24 = sadd.s32 1, %s15
    %s25 = scalar_select %p22, %s24, %s15
    %p26 = scmp.ge.s32.totalorder %s25, 2
    %s27 = scalar_select %p26, 0, %s25
    %s28 = ssub.s32 %s15, %s27
    %s29 = ssub.s32 %s16, %s23
    %s30 = sor.u32 %s28, %s29
    %p31 = scmp.eq.s32.totalorder %s30, 0
    %s33 = sadd.s32 %s32, 1
    %s34 = scalar_select %p31, %s32, %s33
    %p37 = pneg %p31
    %p38 = scmp.eq.s32.totalorder %s8, 7
    %p39 = por %p37, %p38
    %p40 = scmp.ne.s32.totalorder %s32, %s35
    %p41 = scmp.eq.s32.totalorder %s8, 0
    %p42 = por %p40, %p41
    %p43 = scmp.ne.s32.totalorder %s32, %s35
    %p44 = scmp.eq.s32.totalorder %s13, 7
    %p45 = por %p43, %p44
    %p46 = scmp.ne.s32.totalorder %s35, %s36
    %p47 = scmp.eq.s32.totalorder %s13, 0
    %p48 = por %p46, %p47
    %p49 = scmp.ne.s32.totalorder %s35, %s36
    %p50 = scmp.eq.s32.totalorder %s14, 7
    %p51 = por %p49, %p50
    %p53 = scmp.ne.s32.totalorder %s36, %s52
    %p54 = scmp.eq.s32.totalorder %s14, 0
    %p55 = por %p53, %p54
    %s57 = sadd.s32 %s56, 1
    %p60 = scmp.eq.s32.totalorder %s8, 7
    %p61 = scmp.ne.s32.totalorder %s56, %s58
    %p62 = scmp.eq.s32.totalorder %s8, 0
    %p63 = por %p61, %p62
    %p64 = scmp.ne.s32.totalorder %s56, %s58
    %p65 = scmp.eq.s32.totalorder %s13, 7
    %p66 = por %p64, %p65
    %p67 = scmp.ne.s32.totalorder %s58, %s59
    %p68 = scmp.eq.s32.totalorder %s13, 0
    %p69 = por %p67, %p68
    %p70 = scmp.ne.s32.totalorder %s58, %s59
    %p71 = scmp.eq.s32.totalorder %s14, 7
    %p72 = por %p70, %p71
    %p74 = scmp.ne.s32.totalorder %s59, %s73
    %p75 = scmp.eq.s32.totalorder %s14, 0
    %p76 = por %p74, %p75
    %s77 = ssub.s32 %s15, %s27
    %s78 = ssub.s32 %s16, %s23
    %s79 = sor.u32 %s77, %s78
    %p80 = scmp.eq.s32.totalorder %s79, 0
    %s82 = sadd.s32 %s81, 1
    %s83 = scalar_select %p80, %s81, %s82
    %p86 = pneg %p80
    %p87 = scmp.eq.s32.totalorder %s8, 7
    %p88 = por %p86, %p87
    %p89 = scmp.ne.s32.totalorder %s81, %s84
    %p90 = scmp.eq.s32.totalorder %s8, 0
    %p91 = por %p89, %p90
    %p92 = scmp.ne.s32.totalorder %s81, %s84
    %p93 = scmp.eq.s32.totalorder %s13, 7
    %p94 = por %p92, %p93
    %p95 = scmp.ne.s32.totalorder %s84, %s85
    %p96 = scmp.eq.s32.totalorder %s13, 0
    %p97 = por %p95, %p96
    %p98 = scmp.ne.s32.totalorder %s84, %s85
    %p99 = scmp.eq.s32.totalorder %s14, 7
    %p100 = por %p98, %p99
    %p102 = scmp.ne.s32.totalorder %s85, %s101
    %p103 = scmp.eq.s32.totalorder %s14, 0
    %p104 = por %p102, %p103
    %p105 = scmp.le.s32.totalorder 1, %s8
    %p106 = scmp.lt.s32.totalorder %s8, 9
    %p107 = pnand %p105, %p106
    %p108 = pneg %p107
    // Predicated region
    $region9: #{tpu_custom_call.1} parent=5 // pred_check
      _
    $region10: #{tpu_custom_call.1} parent=5 // pred_check_branch
      %110 = sbr.rel (%p107) target = $region12
    $region11: #{tpu_custom_call.1} parent=5 // pred_region
      %s111 = ssub.s32 %s8, 1
      // Predicated region
      $region13: #{tpu_custom_call.1} parent=11 // pred_check
        %p112 = pneg %p69
      $region14: #{tpu_custom_call.1} parent=11 // pred_check_branch
        %114 = sbr.rel (%p112) target = $region16
      $region15: #{tpu_custom_call.1} parent=11 // pred_region
        _
      $region16: #{tpu_custom_call.1} parent=11 // pred_fallthru
        _
    $region12: #{tpu_custom_call.1} parent=5 // pred_fallthru
      _
    %p115 = scmp.lt.s32.totalorder %s8, 8
    // Predicated region
    $region17: #{tpu_custom_call.1} parent=5 // pred_check
      %p116 = pneg %p115
    $region18: #{tpu_custom_call.1} parent=5 // pred_check_branch
      %118 = sbr.rel (%p116) target = $region20
    $region19: #{tpu_custom_call.1} parent=5 // pred_region
      // Predicated region
      $region21: #{tpu_custom_call.1} parent=19 // pred_check
        %p119 = pneg %p42
      $region22: #{tpu_custom_call.1} parent=19 // pred_check_branch
        %121 = sbr.rel (%p119) target = $region24
      $region23: #{tpu_custom_call.1} parent=19 // pred_region
        %s122 = smul.u32 2, %s16
        %p123 = scmp.lt.s32.totalorder %s15, 1
        %s124 = scalar_select %p123, %s15, 1
        %p125 = scmp.lt.s32.totalorder %s122, 7
        %s126 = scalar_select %p125, %s122, 7
        %s127 = smul.addr %s124, 8
        %s128 = sadd.s32 %s126, %s127
        %s129 = smul.addr %s128, 4
        %s130 = scalar_lea.vmem %s0, %s129
        %s131 = smul.u32 2, %s16
      $region24: #{tpu_custom_call.1} parent=19 // pred_fallthru
        _
    $region20: #{tpu_custom_call.1} parent=5 // pred_fallthru
      _
    %p132 = scmp.le.s32.totalorder 1, %s8
    %p133 = scmp.lt.s32.totalorder %s8, 9
    %p134 = pnand %p132, %p133
    %p135 = pneg %p134
    // Predicated region
    $region25: #{tpu_custom_call.1} parent=5 // pred_check
      _
    $region26: #{tpu_custom_call.1} parent=5 // pred_check_branch
      %137 = sbr.rel (%p134) target = $region28
    $region27: #{tpu_custom_call.1} parent=5 // pred_region
      %s138 = ssub.s32 %s8, 1
      %s139 = smul.u32 2, %s18
      %p140 = scmp.lt.s32.totalorder %s17, 1
      %s141 = scalar_select %p140, %s17, 1
      %p142 = scmp.lt.s32.totalorder %s139, 7
      %s143 = scalar_select %p142, %s139, 7
      %s144 = smul.addr %s141, 8
      %s145 = sadd.s32 %s143, %s144
      %s146 = smul.addr %s145, 4
      %s147 = scalar_lea.vmem %s0, %s146
      %p148 = pneg %p48
      %p149 = pneg %p45
      %p150 = pneg %p69
      %p151 = pneg %p66
      %p152 = pneg %p97
      %p153 = pneg %p94
      %s154 = smul.u32 2, %s18
      %p155 = scmp.lt.s32.totalorder %s17, 1
      %s156 = scalar_select %p155, %s17, 1
      %p157 = scmp.lt.s32.totalorder %s154, 7
      %s158 = scalar_select %p157, %s154, 7
      %s159 = smul.addr %s156, 8
      %s160 = sadd.s32 %s158, %s159
      %s161 = smul.addr %s160, 8
      %s162 = scalar_lea.vmem %s2, %s161
      %s163 = smul.u32 2, %s18
      %p164 = scmp.lt.s32.totalorder %s17, 1
      %s165 = scalar_select %p164, %s17, 1
      %p166 = scmp.lt.s32.totalorder %s163, 7
      %s167 = scalar_select %p166, %s163, 7
      %s168 = smul.addr %s165, 8
      %s169 = sadd.s32 %s167, %s168
      %s170 = smul.addr %s169, 4
      %s171 = scalar_lea.vmem %s0, %s170
      %s172 = smul.u32 2, %s18
      %s173 = smul.u32 2, %s18
      %p174 = scmp.lt.s32.totalorder %s17, 1
      %s175 = scalar_select %p174, %s17, 1
      %p176 = scmp.lt.s32.totalorder %s173, 7
      %s177 = scalar_select %p176, %s173, 7
      %s178 = smul.addr %s175, 8
      %s179 = sadd.s32 %s177, %s178
      %s180 = smul.addr %s179, 8
      %s181 = scalar_lea.vmem %s2, %s180
      %s182 = smul.u32 2, %s18
      %v184 = vld [vmem:[%s171] sm:$0xf]
      %v185 = vld [vmem:[%s171 + $0x4] sm:$0xf]
      %v186 = vld [vmem:[%s1] sm:$0xf]
      %v187 = vld [vmem:[%s1 + $0x4] sm:$0xf]
      %v188 = vld [vmem:[%s1 + $0x8] sm:$0xf]
      %v189 = vld [vmem:[%s1 + $0xc] sm:$0xf]
      %v192 = vunpack.c.l.b16 %v184
      %v193 = vunpack.c.l.b16 %v185
      %v194 = vpack.c.b16 %v193, %v192
      %v199 = vunpack.c.l.b16 %v186
      %v200 = vunpack.c.l.b16 %v187
      %v201 = vunpack.c.l.b16 %v188
      %v202 = vunpack.c.l.b16 %v189
      %v203 = vpack.c.b16 %v200, %v199
      %v204 = vpack.c.b16 %v202, %v201
      %vm207 = vcmask 261120
      %v209 = vsel %vm207, %v194, 0
      %211 = vmatprep.subr.bf16.mxu0 0
      %212 = vmatpush1.bf16.msra.mxu0 %v203
      %213 = vmatprep.subr.bf16.mxu0 0
      %214 = vmatpush1.bf16.msra.mxu0 %v204
      %215 = vmatprep.subr.bf16.mxu0 0
      %216 = vmatpush1.bf16.msra.mxu0 0
      %217 = vmatprep.subr.bf16.mxu0 0
      %218 = vmatpush1.bf16.msra.mxu0 0
      %219 = vmatprep.subr.bf16.mxu0 0
      %220 = vmatpush1.bf16.msra.mxu0 0
      %221 = vmatprep.subr.bf16.mxu0 0
      %222 = vmatpush1.bf16.msra.mxu0 0
      %223 = vmatprep.subr.bf16.mxu0 0
      %224 = vmatpush1.bf16.msra.mxu0 0
      %225 = vmatprep.subr.bf16.mxu0 0
      %226 = vmatpush1.bf16.msra.mxu0 0
      %227 = vmatprep.subr.bf16.mxu0 0
      %228 = vmatpush1.bf16.msra.mxu0 0
      %229 = vmatprep.subr.bf16.mxu0 0
      %230 = vmatpush1.bf16.msra.mxu0 0
      %231 = vmatprep.subr.bf16.mxu0 0
      %232 = vmatpush1.bf16.msra.mxu0 0
      %233 = vmatprep.subr.bf16.mxu0 0
      %234 = vmatpush1.bf16.msra.mxu0 0
      %235 = vmatprep.subr.bf16.mxu0 0
      %236 = vmatpush1.bf16.msra.mxu0 0
      %237 = vmatprep.subr.bf16.mxu0 0
      %238 = vmatpush1.bf16.msra.mxu0 0
      %239 = vmatprep.subr.bf16.mxu0 0
      %240 = vmatpush1.bf16.msra.mxu0 0
      %241 = vmatprep.subr.bf16.mxu0 0
      %242 = vmatpush1.bf16.msra.mxu0 0
      %243 = vmatprep.mubr.bf16.mxu0 0
      %244 = vmatmul.mubr.bf16.gmra.mrb[0].mxu0 %v209
      %v245 = vpop.f32.mrb[0].mxu0
      %v246 = vadd.f32 0.0, %v245
      %v247 = vpop.f32.mrb[0].mxu0
      %v248 = vpop.f32.mrb[0].mxu0
      %v249 = vadd.f32 0.0, %v248
      %v250 = vpop.f32.mrb[0].mxu0
      %251 = vdwg.mxu0
      %vm252 = vcmask 785408
      %253 = vst.msk [vmem:[#allocation2] sm:$0xff] %vm252, %v246
      %254 = vst.msk [vmem:[#allocation2 + $0x8] sm:$0xff] %vm252, %v249
      %v255 = vld [vmem:[#allocation2] sm:$0xff]
      %v256 = vld [vmem:[#allocation2 + $0x8] sm:$0xff]
      %vm257 = vcmask 195584
      %258 = vst.msk [vmem:[#allocation3] sm:$0xff] %vm257, %v255
      %259 = vst.msk [vmem:[#allocation3 + $0x8] sm:$0xff] %vm257, %v256
      %v260 = vld [vmem:[#allocation2] sm:$0xff]
      %v261 = vld [vmem:[#allocation2 + $0x8] sm:$0xff]
      %264 = vrot.lane.b32.xlu0 %v260, 104
      %v265 = vpop.permute.xlu0 %264
      %266 = vrot.lane.b32.xlu0 %v261, 104
      %v267 = vpop.permute.xlu0 %266
      %270 = vst.msk [vmem:[#allocation3 + $0x10] sm:$0xff] %vm257, %v265
      %271 = vst.msk [vmem:[#allocation3 + $0x18] sm:$0xff] %vm257, %v267
      %v272 = vld [vmem:[#allocation2] sm:$0xff]
      %v273 = vld [vmem:[#allocation2 + $0x8] sm:$0xff]
      %276 = vrot.lane.b32.xlu0 %v272, 80
      %v277 = vpop.permute.xlu0 %276
      %278 = vrot.lane.b32.xlu0 %v273, 80
      %v279 = vpop.permute.xlu0 %278
      %282 = vst.msk [vmem:[#allocation3 + $0x20] sm:$0xff] %vm257, %v277
      %283 = vst.msk [vmem:[#allocation3 + $0x28] sm:$0xff] %vm257, %v279
      %v284 = vld [vmem:[#allocation2] sm:$0xff]
      %v285 = vld [vmem:[#allocation2 + $0x8] sm:$0xff]
      %288 = vrot.lane.b32.xlu0 %v284, 56
      %v289 = vpop.permute.xlu0 %288
      %290 = vrot.lane.b32.xlu0 %v285, 56
      %v291 = vpop.permute.xlu0 %290
      %294 = vst.msk [vmem:[#allocation3 + $0x30] sm:$0xff] %vm257, %v289
      %295 = vst.msk [vmem:[#allocation3 + $0x38] sm:$0xff] %vm257, %v291
      %v296 = vld [vmem:[#allocation3] sm:$0xff]
      %v297 = vld [vmem:[#allocation3 + $0x8] sm:$0xff]
      %v298 = vld [vmem:[#allocation3 + $0x10] sm:$0xff]
      %v299 = vld [vmem:[#allocation3 + $0x18] sm:$0xff]
      %v300 = vld [vmem:[#allocation3 + $0x20] sm:$0xff]
      %v301 = vld [vmem:[#allocation3 + $0x28] sm:$0xff]
      %v302 = vld [vmem:[#allocation3 + $0x30] sm:$0xff]
      %v303 = vld [vmem:[#allocation3 + $0x38] sm:$0xff]
      %v304 = vpack.c.bf16 %v297, %v296
      %v305 = vpack.c.bf16 %v299, %v298
      %v306 = vpack.c.bf16 %v301, %v300
      %v307 = vpack.c.bf16 %v303, %v302
      %vm308 = vcmask 64512
      %309 = vst.msk [vmem:[#allocation4] sm:$0xff] %vm308, 0.0
      %310 = vst.msk [vmem:[#allocation4 + $0x8] sm:$0xff] %vm308, 0.0
      %311 = vst.msk [vmem:[#allocation4 + $0x10] sm:$0xff] %vm308, 0.0
      %312 = vst.msk [vmem:[#allocation4 + $0x18] sm:$0xff] %vm308, 0.0
      %313 = vst.msk [vmem:[#allocation4 + $0x20] sm:$0xff] %vm308, 0.0
      %314 = vst.msk [vmem:[#allocation4 + $0x28] sm:$0xff] %vm308, 0.0
      %315 = vst.msk [vmem:[#allocation4 + $0x30] sm:$0xff] %vm308, 0.0
      %316 = vst.msk [vmem:[#allocation4 + $0x38] sm:$0xff] %vm308, 0.0
      %321 = vrot.lane.b32.xlu0 %v304, 120
      %v322 = vpop.permute.xlu0 %321
      %323 = vrot.lane.b32.xlu0 %v305, 120
      %v324 = vpop.permute.xlu0 %323
      %325 = vrot.lane.b32.xlu0 %v306, 120
      %v326 = vpop.permute.xlu0 %325
      %327 = vrot.lane.b32.xlu0 %v307, 120
      %v328 = vpop.permute.xlu0 %327
      %v330 = vsel %vm308, %v304, 0
      %v333 = vsel %vm308, %v305, 0
      %v336 = vsel %vm308, %v306, 0
      %v339 = vsel %vm308, %v307, 0
      %v342 = vsel %vm308, %v322, 0
      %v345 = vsel %vm308, %v324, 0
      %v348 = vsel %vm308, %v326, 0
      %v351 = vsel %vm308, %v328, 0
      %353 = vmatprep.subr.bf16.mxu0 0
      %354 = vmatpush1.bf16.xpose.msra.mxu0 %v342
      %355 = vmatprep.subr.bf16.mxu0 0
      %356 = vmatpush1.bf16.xpose.msra.mxu0 %v345
      %357 = vmatprep.subr.bf16.mxu0 0
      %358 = vmatpush1.bf16.xpose.msra.mxu0 %v348
      %359 = vmatprep.subr.bf16.mxu0 0
      %360 = vmatpush1.bf16.xpose.msra.mxu0 %v351
      %361 = vmatprep.subr.bf16.mxu0 0
      %362 = vmatpush1.bf16.xpose.msra.mxu0 0
      %363 = vmatprep.subr.bf16.mxu0 0
      %364 = vmatpush1.bf16.xpose.msra.mxu0 0
      %365 = vmatprep.subr.bf16.mxu0 0
      %366 = vmatpush1.bf16.xpose.msra.mxu0 0
      %367 = vmatprep.subr.bf16.mxu0 0
      %368 = vmatpush1.bf16.xpose.msra.mxu0 0
      %369 = vmatprep.subr.bf16.mxu0 0
      %370 = vmatpush1.bf16.xpose.msra.mxu0 0
      %371 = vmatprep.subr.bf16.mxu0 0
      %372 = vmatpush1.bf16.xpose.msra.mxu0 0
      %373 = vmatprep.subr.bf16.mxu0 0
      %374 = vmatpush1.bf16.xpose.msra.mxu0 0
      %375 = vmatprep.subr.bf16.mxu0 0
      %376 = vmatpush1.bf16.xpose.msra.mxu0 0
      %377 = vmatprep.subr.bf16.mxu0 0
      %378 = vmatpush1.bf16.xpose.msra.mxu0 0
      %379 = vmatprep.subr.bf16.mxu0 0
      %380 = vmatpush1.bf16.xpose.msra.mxu0 0
      %381 = vmatprep.subr.bf16.mxu0 0
      %382 = vmatpush1.bf16.xpose.msra.mxu0 0
      %383 = vmatprep.subr.bf16.mxu0 0
      %384 = vmatpush1.bf16.xpose.msra.mxu0 0
      %385 = vmatprep.mubr.bf16.mxu0 0
      %386 = vmatmul.mubr.bf16.gmra.mrb[0].mxu0 %v330
      %v387 = vpop.f32.mrb[0].mxu0
      %v388 = vadd.f32 0.0, %v387
      %v389 = vpop.f32.mrb[0].mxu0
      %v390 = vpop.f32.mrb[0].mxu0
      %v391 = vadd.f32 0.0, %v390
      %v392 = vpop.f32.mrb[0].mxu0
      %393 = vmatprep.mubr.bf16.mxu0 0
      %394 = vmatmul.mubr.bf16.gmra.mrb[0].mxu0 %v333
      %v395 = vpop.f32.mrb[0].mxu0
      %v396 = vadd.f32 0.0, %v395
      %v397 = vpop.f32.mrb[0].mxu0
      %v398 = vpop.f32.mrb[0].mxu0
      %v399 = vadd.f32 0.0, %v398
      %v400 = vpop.f32.mrb[0].mxu0
      %401 = vmatprep.mubr.bf16.mxu0 0
      %402 = vmatmul.mubr.bf16.gmra.mrb[0].mxu0 %v336
      %v403 = vpop.f32.mrb[0].mxu0
      %v404 = vadd.f32 0.0, %v403
      %v405 = vpop.f32.mrb[0].mxu0
      %v406 = vpop.f32.mrb[0].mxu0
      %v407 = vadd.f32 0.0, %v406
      %v408 = vpop.f32.mrb[0].mxu0
      %409 = vmatprep.mubr.bf16.mxu0 0
      %410 = vmatmul.mubr.bf16.gmra.mrb[0].mxu0 %v339
      %v411 = vpop.f32.mrb[0].mxu0
      %v412 = vadd.f32 0.0, %v411
      %v413 = vpop.f32.mrb[0].mxu0
      %v414 = vpop.f32.mrb[0].mxu0
      %v415 = vadd.f32 0.0, %v414
      %v416 = vpop.f32.mrb[0].mxu0
      %417 = vdwg.mxu0
      %vm418 = vcmask 523264
      %v419 = vsel %vm418, %v388, -inf
      %v420 = vsel %vm418, %v391, -inf
      %v421 = vsel %vm418, %v396, -inf
      %v422 = vsel %vm418, %v399, -inf
      %v423 = vsel %vm418, %v404, -inf
      %v424 = vmax.f32 %v419, %v423
      %v425 = vsel %vm418, %v407, -inf
      %v426 = vmax.f32 %v420, %v425
      %v427 = vsel %vm418, %v412, -inf
      %v428 = vmax.f32 %v421, %v427
      %v429 = vsel %vm418, %v415, -inf
      %v430 = vmax.f32 %v422, %v429
      %v431 = vmax.f32 %v424, %v426
      %v432 = vmax.f32 %v428, %v430
      %v433 = vmax.f32 %v431, %v432
      %v434 = vrot.slane %v433, 4
      %v435 = vmax.f32 %v433, %v434
      %v436 = vrot.slane %v435, 2
      %v437 = vmax.f32 %v435, %v436
      %v438 = vrot.slane %v437, 1
      %v439 = vmax.f32 %v437, %v438
      %v440 = vsub.f32 %v388, %v439
      %v441 = vsub.f32 %v391, %v439
      %v442 = vsub.f32 %v396, %v439
      %v443 = vsub.f32 %v399, %v439
      %v444 = vsub.f32 %v404, %v439
      %v445 = vsub.f32 %v407, %v439
      %v446 = vsub.f32 %v412, %v439
      %v447 = vsub.f32 %v415, %v439
      %v448 = vmul.f32 %v440, 1.442695
      %v449 = vpow.pop %v448
      %v450 = vmul.f32 %v441, 1.442695
      %v451 = vpow.pop %v450
      %v452 = vmul.f32 %v442, 1.442695
      %v453 = vpow.pop %v452
      %v454 = vmul.f32 %v443, 1.442695
      %v455 = vpow.pop %v454
      %v456 = vmul.f32 %v444, 1.442695
      %v457 = vpow.pop %v456
      %v458 = vmul.f32 %v445, 1.442695
      %v459 = vpow.pop %v458
      %v460 = vmul.f32 %v446, 1.442695
      %v461 = vpow.pop %v460
      %v462 = vmul.f32 %v447, 1.442695
      %v463 = vpow.pop %v462
      %v464 = vsel %vm418, %v449, 0.0
      %v465 = vsel %vm418, %v451, 0.0
      %v466 = vadd.f32 %v464, %v465
      %v467 = vsel %vm418, %v453, 0.0
      %v468 = vadd.f32 %v466, %v467
      %v469 = vsel %vm418, %v455, 0.0
      %v470 = vadd.f32 %v468, %v469
      %v471 = vsel %vm418, %v457, 0.0
      %v472 = vadd.f32 %v470, %v471
      %v473 = vsel %vm418, %v459, 0.0
      %v474 = vadd.f32 %v472, %v473
      %v475 = vsel %vm418, %v461, 0.0
      %v476 = vadd.f32 %v474, %v475
      %v477 = vsel %vm418, %v463, 0.0
      %v478 = vadd.f32 %v476, %v477
      %v479 = vrot.slane %v478, 4
      %v480 = vadd.f32 %v478, %v479
      %v481 = vrot.slane %v480, 2
      %v482 = vadd.f32 %v480, %v481
      %v483 = vrot.slane %v482, 1
      %v484 = vadd.f32 %v482, %v483
      %v485 = vrcp.pop %v484
      %v486 = vmul.f32 %v449, %v485
      %v487 = vmul.f32 %v451, %v485
      %v488 = vmul.f32 %v453, %v485
      %v489 = vmul.f32 %v455, %v485
      %v490 = vmul.f32 %v457, %v485
      %v491 = vmul.f32 %v459, %v485
      %v492 = vmul.f32 %v461, %v485
      %v493 = vmul.f32 %v463, %v485
      %v494 = vld [vmem:[#allocation4] sm:$0xff]
      %v495 = vld [vmem:[#allocation4 + $0x8] sm:$0xff]
      %v496 = vld [vmem:[#allocation4 + $0x10] sm:$0xff]
      %v497 = vld [vmem:[#allocation4 + $0x18] sm:$0xff]
      %v498 = vld [vmem:[#allocation4 + $0x20] sm:$0xff]
      %v499 = vld [vmem:[#allocation4 + $0x28] sm:$0xff]
      %v500 = vld [vmem:[#allocation4 + $0x30] sm:$0xff]
      %v501 = vld [vmem:[#allocation4 + $0x38] sm:$0xff]
      %v502 = vpack.c.bf16 %v487, %v486
      %v503 = vpack.c.bf16 %v489, %v488
      %v504 = vpack.c.bf16 %v491, %v490
      %v505 = vpack.c.bf16 %v493, %v492
      %506 = vrot.lane.b32.xlu0 %v304, 112
      %v507 = vpop.permute.xlu0 %506
      %508 = vrot.lane.b32.xlu0 %v305, 112
      %v509 = vpop.permute.xlu0 %508
      %510 = vrot.lane.b32.xlu0 %v306, 112
      %v511 = vpop.permute.xlu0 %510
      %512 = vrot.lane.b32.xlu0 %v307, 112
      %v513 = vpop.permute.xlu0 %512
      %v519 = vsel %vm418, %v502, 0
      %v522 = vsel %vm418, %v503, 0
      %v525 = vsel %vm418, %v504, 0
      %v528 = vsel %vm418, %v505, 0
      %530 = vmatprep.subr.bf16.mxu0 0
      %531 = vmatpush1.bf16.msra.mxu0 %v507
      %532 = vmatprep.subr.bf16.mxu0 0
      %533 = vmatpush1.bf16.msra.mxu0 %v509
      %534 = vmatprep.subr.bf16.mxu0 0
      %535 = vmatpush1.bf16.msra.mxu0 %v511
      %536 = vmatprep.subr.bf16.mxu0 0
      %537 = vmatpush1.bf16.msra.mxu0 %v513
      %538 = vmatprep.subr.bf16.mxu0 0
      %539 = vmatpush1.bf16.msra.mxu0 0
      %540 = vmatprep.subr.bf16.mxu0 0
      %541 = vmatpush1.bf16.msra.mxu0 0
      %542 = vmatprep.subr.bf16.mxu0 0
      %543 = vmatpush1.bf16.msra.mxu0 0
      %544 = vmatprep.subr.bf16.mxu0 0
      %545 = vmatpush1.bf16.msra.mxu0 0
      %546 = vmatprep.subr.bf16.mxu0 0
      %547 = vmatpush1.bf16.msra.mxu0 0
      %548 = vmatprep.subr.bf16.mxu0 0
      %549 = vmatpush1.bf16.msra.mxu0 0
      %550 = vmatprep.subr.bf16.mxu0 0
      %551 = vmatpush1.bf16.msra.mxu0 0
      %552 = vmatprep.subr.bf16.mxu0 0
      %553 = vmatpush1.bf16.msra.mxu0 0
      %554 = vmatprep.subr.bf16.mxu0 0
      %555 = vmatpush1.bf16.msra.mxu0 0
      %556 = vmatprep.subr.bf16.mxu0 0
      %557 = vmatpush1.bf16.msra.mxu0 0
      %558 = vmatprep.subr.bf16.mxu0 0
      %559 = vmatpush1.bf16.msra.mxu0 0
      %560 = vmatprep.subr.bf16.mxu0 0
      %561 = vmatpush1.bf16.msra.mxu0 0
      %562 = vmatprep.mubr.bf16.mxu0 0
      %563 = vmatmul.mubr.bf16.gmra.mrb[0].mxu0 %v519
      %v564 = vpop.f32.mrb[0].mxu0
      %v565 = vadd.f32 0.0, %v564
      %v566 = vpop.f32.mrb[0].mxu0
      %v567 = vpop.f32.mrb[0].mxu0
      %v568 = vadd.f32 0.0, %v567
      %v569 = vpop.f32.mrb[0].mxu0
      %570 = vmatprep.mubr.bf16.mxu0 0
      %571 = vmatmul.mubr.bf16.gmra.mrb[0].mxu0 %v522
      %v572 = vpop.f32.mrb[0].mxu0
      %v573 = vadd.f32 0.0, %v572
      %v574 = vpop.f32.mrb[0].mxu0
      %v575 = vpop.f32.mrb[0].mxu0
      %v576 = vadd.f32 0.0, %v575
      %v577 = vpop.f32.mrb[0].mxu0
      %578 = vmatprep.mubr.bf16.mxu0 0
      %579 = vmatmul.mubr.bf16.gmra.mrb[0].mxu0 %v525
      %v580 = vpop.f32.mrb[0].mxu0
      %v581 = vadd.f32 0.0, %v580
      %v582 = vpop.f32.mrb[0].mxu0
      %v583 = vpop.f32.mrb[0].mxu0
      %v584 = vadd.f32 0.0, %v583
      %v585 = vpop.f32.mrb[0].mxu0
      %586 = vmatprep.mubr.bf16.mxu0 0
      %587 = vmatmul.mubr.bf16.gmra.mrb[0].mxu0 %v528
      %v588 = vpop.f32.mrb[0].mxu0
      %v589 = vadd.f32 0.0, %v588
      %v590 = vpop.f32.mrb[0].mxu0
      %v591 = vpop.f32.mrb[0].mxu0
      %v592 = vadd.f32 0.0, %v591
      %v593 = vpop.f32.mrb[0].mxu0
      %594 = vdwg.mxu0
      %v595 = vadd.f32 %v494, %v565
      %v596 = vadd.f32 %v495, %v568
      %v597 = vadd.f32 %v496, %v573
      %v598 = vadd.f32 %v497, %v576
      %v599 = vadd.f32 %v498, %v581
      %v600 = vadd.f32 %v499, %v584
      %v601 = vadd.f32 %v500, %v589
      %v602 = vadd.f32 %v501, %v592
      %603 = vst.msk [vmem:[#allocation4] sm:$0xff] %vm308, %v595
      %604 = vst.msk [vmem:[#allocation4 + $0x8] sm:$0xff] %vm308, %v596
      %605 = vst.msk [vmem:[#allocation4 + $0x10] sm:$0xff] %vm308, %v597
      %606 = vst.msk [vmem:[#allocation4 + $0x18] sm:$0xff] %vm308, %v598
      %607 = vst.msk [vmem:[#allocation4 + $0x20] sm:$0xff] %vm308, %v599
      %608 = vst.msk [vmem:[#allocation4 + $0x28] sm:$0xff] %vm308, %v600
      %609 = vst.msk [vmem:[#allocation4 + $0x30] sm:$0xff] %vm308, %v601
      %610 = vst.msk [vmem:[#allocation4 + $0x38] sm:$0xff] %vm308, %v602
      %v611 = vld [vmem:[#allocation4] sm:$0xff]
      %v612 = vld [vmem:[#allocation4 + $0x8] sm:$0xff]
      %613 = vst.msk [vmem:[%s181] sm:$0xff] %vm308, %v611
      %614 = vst.msk [vmem:[%s181 + $0x8] sm:$0xff] %vm308, %v612
      %v615 = vld [vmem:[#allocation4 + $0x10] sm:$0xff]
      %v616 = vld [vmem:[#allocation4 + $0x18] sm:$0xff]
      %619 = vrot.lane.b32.xlu0 %v615, 8
      %v620 = vpop.permute.xlu0 %619
      %621 = vrot.lane.b32.xlu0 %v616, 8
      %v622 = vpop.permute.xlu0 %621
      %vm625 = vcmask 130112
      %626 = vst.msk [vmem:[%s181] sm:$0xff] %vm625, %v620
      %627 = vst.msk [vmem:[%s181 + $0x8] sm:$0xff] %vm625, %v622
      %v628 = vld [vmem:[#allocation4 + $0x20] sm:$0xff]
      %v629 = vld [vmem:[#allocation4 + $0x28] sm:$0xff]
      %632 = vrot.lane.b32.xlu0 %v628, 16
      %v633 = vpop.permute.xlu0 %632
      %634 = vrot.lane.b32.xlu0 %v629, 16
      %v635 = vpop.permute.xlu0 %634
      %vm638 = vcmask 195712
      %639 = vst.msk [vmem:[%s181] sm:$0xff] %vm638, %v633
      %640 = vst.msk [vmem:[%s181 + $0x8] sm:$0xff] %vm638, %v635
      %v641 = vld [vmem:[#allocation4 + $0x30] sm:$0xff]
      %v642 = vld [vmem:[#allocation4 + $0x38] sm:$0xff]
      %645 = vrot.lane.b32.xlu0 %v641, 24
      %v646 = vpop.permute.xlu0 %645
      %647 = vrot.lane.b32.xlu0 %v642, 24
      %v648 = vpop.permute.xlu0 %647
      %vm651 = vcmask 261312
      %652 = vst.msk [vmem:[%s181] sm:$0xff] %vm651, %v646
      %653 = vst.msk [vmem:[%s181 + $0x8] sm:$0xff] %vm651, %v648
      %s654 = smul.u32 2, %s18
      %p655 = scmp.lt.s32.totalorder %s17, 1
      %s656 = scalar_select %p655, %s17, 1
      %p657 = scmp.lt.s32.totalorder %s654, 7
      %s658 = scalar_select %p657, %s654, 7
      %s659 = smul.addr %s656, 8
      %s660 = sadd.s32 %s658, %s659
      %s661 = smul.addr %s660, 8
      %s662 = scalar_lea.vmem %s2, %s661
      // Predicated region
      $region29: #{tpu_custom_call.1} parent=27 // pred_check
        %p663 = pneg %p94
      $region30: #{tpu_custom_call.1} parent=27 // pred_check_branch
        %665 = sbr.rel (%p663) target = $region32
      $region31: #{tpu_custom_call.1} parent=27 // pred_region
        %s666 = smul.u32 2, %s18
      $region32: #{tpu_custom_call.1} parent=27 // pred_fallthru
        _
    $region28: #{tpu_custom_call.1} parent=5 // pred_fallthru
      _
    %p667 = scmp.le.s32.totalorder 2, %s8
    // Predicated region
    $region33: #{tpu_custom_call.1} parent=5 // pred_check
      %p668 = pneg %p667
    $region34: #{tpu_custom_call.1} parent=5 // pred_check_branch
      %670 = sbr.rel (%p668) target = $region36
    $region35: #{tpu_custom_call.1} parent=5 // pred_region
      %s671 = ssub.s32 %s8, 2
      // Predicated region
      $region37: #{tpu_custom_call.1} parent=35 // pred_check
        %p672 = pneg %p100
      $region38: #{tpu_custom_call.1} parent=35 // pred_check_branch
        %674 = sbr.rel (%p672) target = $region40
      $region39: #{tpu_custom_call.1} parent=35 // pred_region
        %s675 = smul.u32 2, %s20
        %p676 = scmp.lt.s32.totalorder %s19, 1
        %s677 = scalar_select %p676, %s19, 1
        %p678 = scmp.lt.s32.totalorder %s675, 7
        %s679 = scalar_select %p678, %s675, 7
        %s680 = smul.addr %s677, 8
        %s681 = sadd.s32 %s679, %s680
        %s682 = smul.addr %s681, 8
        %s683 = scalar_lea.vmem %s2, %s682
      $region40: #{tpu_custom_call.1} parent=35 // pred_fallthru
        _
    $region36: #{tpu_custom_call.1} parent=5 // pred_fallthru
      _
  $region6: #{tpu_custom_call.1} parent=0 // loop_footer
    %s12 = sadd.s32 1, %s8
  $region7: #{tpu_custom_call.1} parent=0 // loop_footer_branch
    %7 = sbr.rel target = $region3
  $region8: #{tpu_custom_call.1} parent=0 // loop_exit
    _

</llo_original>
